<compile_context>
chip_gen: v5e
topology: v5e:2x2
jax: 0.10.0
libtpu: 0.0.40
codegen_flags: <defaults>
</compile_context>

<pallas_src>
import jax
import jax.numpy as jnp
from jax.experimental import pallas as pl
from jax.experimental.pallas import tpu as pltpu

EPS = 1e-5
NEG_SLOPE = 0.2


def _make_conv_block_kernel(k, d, h, w, cin, cout, add_residual):
    """Fused Conv3d('same') + bias + LeakyReLU(0.2) + InstanceNorm3d [+ residual].

    Refs (one batch element per grid step, channels-first / lane-dense output):
      x_ref : (1, d+2p, h+2p, w+2p, cin)  bf16  halo-padded NDHWC tile
      w_ref : (cout, k^3*cin)             bf16  weights, (kd,kh,kw,cin) col order
      b_ref : (cout, 1)                   f32   bias
      [r_ref: (1, cout, S)                f32   residual (block0 output h)]
      o_ref : (1, cout, S)                f32   S = d*h*w  (lane-dense last dim)
    """
    s = d * h * w
    inv_s = 1.0 / float(s)

    def kernel(*refs):
        if add_residual:
            x_ref, w_ref, b_ref, r_ref, o_ref = refs
        else:
            x_ref, w_ref, b_ref, o_ref = refs
            r_ref = None

        # Halo-padded input tile (bf16 DMA); cast up once so all slicing /
        # reshaping happens on f32 (native sublane layout).
        xp = x_ref[0].astype(jnp.float32)              # [dp, hp, wp, cin]

        # In-VMEM im2col: K^3 shifted views -> [S, K^3*cin]. No HBM inflation.
        cols = []
        for kd in range(k):
            for kh in range(k):
                for kw in range(k):
                    sl = xp[kd:kd + d, kh:kh + h, kw:kw + w, :]
                    cols.append(sl.reshape(s, cin))
        patches = jnp.concatenate(cols, axis=1) if len(cols) > 1 else cols[0]
        patches = patches.astype(jnp.bfloat16)         # [S, P] for the MXU

        # Transposed matmul: [cout, P] x [S, P]^T -> [cout, S]; the large S
        # dimension (multiple of 128) feeds the MXU output / lane axis.
        y = jax.lax.dot_general(
            w_ref[...], patches,
            dimension_numbers=(((1,), (1,)), ((), ())),
            preferred_element_type=jnp.float32)        # [cout, S] f32
        y = y + b_ref[...]                             # bias
        y = jnp.where(y >= 0, y, NEG_SLOPE * y)        # LeakyReLU(0.2)

        # InstanceNorm3d (affine=False, biased var, eps=1e-5): single pass over
        # the lane axis (sum and sum-of-squares), stats in f32.
        s1 = jnp.sum(y, axis=1, keepdims=True)         # [cout, 1]
        s2 = jnp.sum(y * y, axis=1, keepdims=True)     # [cout, 1]
        mean = s1 * inv_s
        var = jnp.maximum(s2 * inv_s - mean * mean, 0.0)
        y = (y - mean) * jax.lax.rsqrt(var + EPS)

        if add_residual:                               # fused h + x
            y = y + r_ref[0]

        o_ref[0] = y

    return kernel


def conv_block(x_ncdhw, weight, bias, k, residual=None):
    """One ConvBlock. x: [N, Cin, D, H, W]; weight: [Cout, Cin, K, K, K]
    (PyTorch layout); bias: [Cout]. Optional residual [N, Cout, S] is added
    before the final store. Returns [N, Cout, S] float32 with S = D*H*W."""
    n, cin, d, h, w = x_ncdhw.shape
    cout = weight.shape[0]
    s = d * h * w
    pad = k // 2
    p_dim = k * k * k * cin

    # NCDHW -> NDHWC, zero 'same' halo, bf16 for DMA/MXU.
    x_cl = jnp.transpose(x_ncdhw, (0, 2, 3, 4, 1))
    if pad:
        x_cl = jnp.pad(x_cl, ((0, 0), (pad, pad), (pad, pad), (pad, pad), (0, 0)))
    x_cl = x_cl.astype(jnp.bfloat16)
    dp, hp, wp = d + 2 * pad, h + 2 * pad, w + 2 * pad

    # Weight columns ordered (kd, kh, kw, cin) to match the in-kernel im2col.
    w_mat = jnp.transpose(weight, (0, 2, 3, 4, 1)).reshape(cout, p_dim)
    w_mat = w_mat.astype(jnp.bfloat16)
    b_mat = bias.reshape(cout, 1).astype(jnp.float32)

    add_residual = residual is not None
    kernel = _make_conv_block_kernel(k, d, h, w, cin, cout, add_residual)

    in_specs = [
        pl.BlockSpec((1, dp, hp, wp, cin), lambda i: (i, 0, 0, 0, 0)),
        pl.BlockSpec((cout, p_dim), lambda i: (0, 0)),
        pl.BlockSpec((cout, 1), lambda i: (0, 0)),
    ]
    args = [x_cl, w_mat, b_mat]
    if add_residual:
        in_specs.append(pl.BlockSpec((1, cout, s), lambda i: (i, 0, 0)))
        args.append(residual)

    return pl.pallas_call(
        kernel,
        out_shape=jax.ShapeDtypeStruct((n, cout, s), jnp.float32),
        grid_spec=pltpu.PrefetchScalarGridSpec(
            num_scalar_prefetch=0,
            grid=(n,),
            in_specs=in_specs,
            out_specs=pl.BlockSpec((1, cout, s), lambda i: (i, 0, 0)),
        ),
        compiler_params=pltpu.CompilerParams(
            dimension_semantics=("parallel",),   # batch split across TCs (v7x)
            vmem_limit_bytes=32 * 1024 * 1024,
        ),
    )(*args)


def conv_layer_forward(x_ncdhw, params, kernel_size):
    """ConvLayer.forward. x: [N, Cin, D, H, W] -> [N, Cout, D, H, W]."""
    n, cin, d, h, w = x_ncdhw.shape
    s = d * h * w

    w0, b0 = params["block0"]
    cout = w0.shape[0]

    # h = block0(x): 1x1x1 conv block (no patch building, K^3 == 1).
    h_flat = conv_block(x_ncdhw, w0, b0, 1)                        # [N, Cout, S]

    layer_params = params["layer"]
    if not layer_params:
        # TODO(synk): conv_num == 1 edge case — PyTorch adds the *raw* input
        # (only shape-valid when Cin == Cout); plain add, nothing to fuse.
        out_flat = h_flat + x_ncdhw.reshape(n, cin, s).astype(jnp.float32)
    else:
        cur = x_ncdhw
        out_flat = None
        last = len(layer_params) - 1
        for idx, (wl, bl) in enumerate(layer_params):
            res = h_flat if idx == last else None                  # fuse h + x
            out_flat = conv_block(cur, wl, bl, kernel_size, residual=res)
            if idx != last:
                cur = out_flat.reshape(n, wl.shape[0], d, h, w)

    return out_flat.reshape(n, cout, d, h, w)                      # NCDHW


def _init_conv(kw, kb, cin, cout, ksz):
    # Deterministic init mimicking PyTorch's default uniform(-1/sqrt(fan_in), +).
    fan_in = cin * ksz ** 3
    bound = 1.0 / (fan_in ** 0.5)
    wgt = jax.random.uniform(kw, (cout, cin, ksz, ksz, ksz), jnp.float32, -bound, bound)
    bia = jax.random.uniform(kb, (cout,), jnp.float32, -bound, bound)
    return wgt, bia


if __name__ == "__main__":
    # ConvLayer(conv_num=2, in_channels=4, out_channels=4, kernel_size=3)
    N, CIN, COUT, D, H, W = 2, 4, 4, 8, 8, 8
    K = 3
    CONV_NUM = 2

    key = jax.random.PRNGKey(0)
    kx, k1, k2, k3, k4 = jax.random.split(key, 5)
    x = jax.random.normal(kx, (N, CIN, D, H, W), jnp.float32)

    params = {
        "block0": _init_conv(k1, k2, CIN, COUT, 1),
        # NOTE: PyTorch's self.block1 is instantiated but unused in forward.
        "layer": [_init_conv(k3, k4, CIN, COUT, K) for _ in range(CONV_NUM - 1)],
    }

    out = conv_layer_forward(x, params, K)
    jax.block_until_ready(out)
    assert out.shape == (N, COUT, D, H, W) and out.dtype == jnp.float32
    assert bool(jnp.all(jnp.isfinite(out)))
    print("KERNEL_OK")
</pallas_src>

<mosaic_0001>
module attributes {stable_mosaic.version = 11 : i64} {
  func.func @kernel(%arg0: i32, %arg1: memref<1x8x8x8x4xbf16, #tpu.memory_space<vmem>>, %arg2: memref<4x4xbf16, #tpu.memory_space<vmem>>, %arg3: memref<4x1xf32, #tpu.memory_space<vmem>>, %arg4: memref<1x4x512xf32, #tpu.memory_space<vmem>>) attributes {dimension_semantics = [#tpu.dimension_semantics<parallel>], iteration_bounds = array<i64: 2>, scalar_prefetch = 0 : i64, scratch_operands = 0 : i64, tpu.core_type = #tpu.core_type<tc>, window_params = [{transform_indices = @transform_0, window_bounds = array<i64: 1, 8, 8, 8, 4>}, {pipeline_mode = #tpu.pipeline_mode<synchronous>, transform_indices = @transform_1, window_bounds = array<i64: 4, 4>}, {pipeline_mode = #tpu.pipeline_mode<synchronous>, transform_indices = @transform_2, window_bounds = array<i64: 4, 1>}, {transform_indices = @transform_3, window_bounds = array<i64: 1, 4, 512>}]} {
    %c0 = arith.constant 0 : index
    %c0_0 = arith.constant 0 : index
    %c0_1 = arith.constant 0 : index
    %c0_2 = arith.constant 0 : index
    %c0_3 = arith.constant 0 : index
    %0 = vector.load %arg1[%c0, %c0_0, %c0_1, %c0_2, %c0_3] : memref<1x8x8x8x4xbf16, #tpu.memory_space<vmem>>, vector<1x8x8x8x4xbf16>
    %1 = vector.shape_cast %0 : vector<1x8x8x8x4xbf16> to vector<8x8x8x4xbf16>
    %2 = arith.extf %1 : vector<8x8x8x4xbf16> to vector<8x8x8x4xf32>
    %3 = vector.shape_cast %2 : vector<8x8x8x4xf32> to vector<512x4xf32>
    %4 = arith.truncf %3 : vector<512x4xf32> to vector<512x4xbf16>
    %c0_4 = arith.constant 0 : index
    %c0_5 = arith.constant 0 : index
    %5 = vector.load %arg2[%c0_4, %c0_5] : memref<4x4xbf16, #tpu.memory_space<vmem>>, vector<4x4xbf16>
    %cst = arith.constant dense<0.000000e+00> : vector<4x512xf32>
    %6 = tpu.matmul %5, %4, %cst {dimension_numbers = #tpu.dot_dimension_numbers<[1], [1], [0], [0], [0, 0, 1, 0], [], []>} : vector<4x4xbf16>, vector<512x4xbf16>, vector<4x512xf32> -> vector<4x512xf32>
    %c0_6 = arith.constant 0 : index
    %c0_7 = arith.constant 0 : index
    %7 = vector.load %arg3[%c0_6, %c0_7] : memref<4x1xf32, #tpu.memory_space<vmem>>, vector<4x1xf32>
    %8 = vector.broadcast %7 : vector<4x1xf32> to vector<4x512xf32>
    %9 = arith.addf %6, %8 : vector<4x512xf32>
    %cst_8 = arith.constant 0.000000e+00 : f32
    %10 = vector.broadcast %cst_8 : f32 to vector<4x512xf32>
    %11 = arith.cmpf oge, %9, %10 : vector<4x512xf32>
    %cst_9 = arith.constant 2.000000e-01 : f32
    %12 = vector.broadcast %cst_9 : f32 to vector<4x512xf32>
    %13 = arith.mulf %12, %9 : vector<4x512xf32>
    %14 = arith.select %11, %9, %13 : vector<4x512xi1>, vector<4x512xf32>
    %cst_10 = arith.constant dense<0.000000e+00> : vector<4xf32>
    %15 = vector.multi_reduction <add>, %14, %cst_10 [1] : vector<4x512xf32> to vector<4xf32>
    %16 = vector.shape_cast %15 : vector<4xf32> to vector<4x1xf32>
    %17 = arith.mulf %14, %14 : vector<4x512xf32>
    %cst_11 = arith.constant dense<0.000000e+00> : vector<4xf32>
    %18 = vector.multi_reduction <add>, %17, %cst_11 [1] : vector<4x512xf32> to vector<4xf32>
    %19 = vector.shape_cast %18 : vector<4xf32> to vector<4x1xf32>
    %cst_12 = arith.constant 0.001953125 : f32
    %20 = vector.broadcast %cst_12 : f32 to vector<4x1xf32>
    %21 = arith.mulf %16, %20 : vector<4x1xf32>
    %cst_13 = arith.constant 0.001953125 : f32
    %22 = vector.broadcast %cst_13 : f32 to vector<4x1xf32>
    %23 = arith.mulf %19, %22 : vector<4x1xf32>
    %24 = arith.mulf %21, %21 : vector<4x1xf32>
    %25 = arith.subf %23, %24 : vector<4x1xf32>
    %cst_14 = arith.constant 0.000000e+00 : f32
    %26 = vector.broadcast %cst_14 : f32 to vector<4x1xf32>
    %27 = arith.maximumf %25, %26 : vector<4x1xf32>
    %28 = vector.broadcast %21 : vector<4x1xf32> to vector<4x512xf32>
    %29 = arith.subf %14, %28 : vector<4x512xf32>
    %cst_15 = arith.constant 9.99999974E-6 : f32
    %30 = vector.broadcast %cst_15 : f32 to vector<4x1xf32>
    %31 = arith.addf %27, %30 : vector<4x1xf32>
    %32 = math.rsqrt %31 : vector<4x1xf32>
    %33 = vector.broadcast %32 : vector<4x1xf32> to vector<4x512xf32>
    %34 = arith.mulf %29, %33 : vector<4x512xf32>
    %c0_16 = arith.constant 0 : index
    %c0_17 = arith.constant 0 : index
    %c0_18 = arith.constant 0 : index
    %35 = vector.load %arg4[%c0_16, %c0_17, %c0_18] : memref<1x4x512xf32, #tpu.memory_space<vmem>>, vector<1x4x512xf32>
    %36 = vector.shape_cast %35 : vector<1x4x512xf32> to vector<4x512xf32>
    %37 = vector.shape_cast %34 : vector<4x512xf32> to vector<1x4x512xf32>
    tpu.vector_store %arg4[%c0_16, %c0_17, %c0_18], %37 {strides = array<i32>} : memref<1x4x512xf32, #tpu.memory_space<vmem>>, vector<1x4x512xf32>,
    return
  }
  func.func @transform_0(%arg0: i32) -> (i32, i32, i32, i32, i32) {
    %c0_i32 = arith.constant 0 : i32
    %c0_i32_0 = arith.constant 0 : i32
    %c0_i32_1 = arith.constant 0 : i32
    %c0_i32_2 = arith.constant 0 : i32
    %c0_i32_3 = arith.constant 0 : i32
    return %arg0, %c0_i32, %c0_i32_0, %c0_i32_1, %c0_i32_2 : i32, i32, i32, i32, i32
  }
  func.func @transform_1(%arg0: i32) -> (i32, i32) {
    %c0_i32 = arith.constant 0 : i32
    %c0_i32_0 = arith.constant 0 : i32
    %c0_i32_1 = arith.constant 0 : i32
    return %c0_i32, %c0_i32_0 : i32, i32
  }
  func.func @transform_2(%arg0: i32) -> (i32, i32) {
    %c0_i32 = arith.constant 0 : i32
    %c0_i32_0 = arith.constant 0 : i32
    %c0_i32_1 = arith.constant 0 : i32
    return %c0_i32, %c0_i32_0 : i32, i32
  }
  func.func @transform_3(%arg0: i32) -> (i32, i32, i32) {
    %c0_i32 = arith.constant 0 : i32
    %c0_i32_0 = arith.constant 0 : i32
    %c0_i32_1 = arith.constant 0 : i32
    return %arg0, %c0_i32, %c0_i32_0 : i32, i32, i32
  }
}

</mosaic_0001>

<llo_original>
// kernel: tpu_custom_call.1
$region0: #{tpu_custom_call.1}
  #allocation0 [shape = 'u32[]', space=smem, size = 0x4, offset = 0x4, fixed_abs, tag = 'smem constant byte address 0x4 - core index']
  #allocation1 [shape = 'u32[72,128]{1,0:T(1,128)}', space=vmem, size = 0x9000, scoped, tag = 'internal scratch']
  %s0 = inlined_call_operand.vmem [shape: bf16[2,8,8,8,4], index: 0, kind: input, shape index: {}]
  %s1 = inlined_call_operand.vmem [shape: bf16[4,4], index: 1, kind: input, shape index: {}]
  %s2 = inlined_call_operand.vmem [shape: f32[4,1], index: 2, kind: input, shape index: {}]
  %s3 = inlined_call_operand.hbm [shape: f32[2,4,512], index: 3, kind: output, shape index: {}]
  %s4 = sld [smem:[#allocation0]]
  $region45: #{tpu_custom_call.1} parent=0
    _
  %s6 = ssub.s32 1, %s4
  %s7 = scalar_select 0, %s6, %s4
  $region1: #{tpu_custom_call.1} parent=0
    #allocation2 [shape = 'u8[16384]{0}', space=vmem, size = 0x4000, scoped, tag = 'output window, operand 0']
    #allocation3 [shape = 's32[2]{0}', space=sflag, size = 0x8, scoped, tag = 'scoped memory for tpu_custom_call.1']
    %8 = vsyncpa [#allocation3], 0
    %s9 = scalar_lea.sflag [#allocation3], 1
    %10 = vsyncpa %s9, 0
    loop: start=0, step=1, limit=4
    $region2: #{tpu_custom_call.1} parent=1 // loop_pre_header
      _
    $region3: #{tpu_custom_call.1} parent=1 // loop_header
      %s12 = sphi 0, %s16
      %p13 = scmp.ge.s32.totalorder %s12, 4
      %s22 = sphi 0, %s24
      %s25 = sphi 0, %s22
      %s26 = sphi 0, %s25
      %s42 = sphi 0, %s26
      %s46 = sphi 0, %s46
      %s48 = sphi 0, %s46
      %s49 = sphi 0, %s48
      %s63 = sphi 0, %s49
      %s67 = sphi 0, %s67
      %s69 = sphi 0, %s67
      %s70 = sphi 0, %s69
      %s84 = sphi 0, %s70
      %s90 = sphi 0, %s92
      %s93 = sphi 0, %s90
      %s94 = sphi 0, %s93
      %s110 = sphi 0, %s94
    $region4: #{tpu_custom_call.1} parent=1 // loop_header_branch
      %15 = sbr.rel (%p13) target = $region8
    $region5: #{tpu_custom_call.1} parent=1 // loop_body
      %s17 = ssub.s32 %s12, 1
      %s18 = ssub.s32 %s12, 2
      %s19 = sadd.s32 %s12, 1
      %s20 = ssub.s32 %s12, %s19
      %p21 = scmp.eq.s32.totalorder %s20, 0
      %s23 = sadd.s32 %s22, 1
      %s24 = scalar_select %p21, %s22, %s23
      %p27 = pneg %p21
      %p28 = scmp.eq.s32.totalorder %s12, 1
      %p29 = por %p27, %p28
      %p30 = scmp.ne.s32.totalorder %s22, %s25
      %p31 = scmp.eq.s32.totalorder %s12, 0
      %p32 = por %p30, %p31
      %p33 = scmp.ne.s32.totalorder %s22, %s25
      %p34 = scmp.eq.s32.totalorder %s17, 1
      %p35 = por %p33, %p34
      %p36 = scmp.ne.s32.totalorder %s25, %s26
      %p37 = scmp.eq.s32.totalorder %s17, 0
      %p38 = por %p36, %p37
      %p39 = scmp.ne.s32.totalorder %s25, %s26
      %p40 = scmp.eq.s32.totalorder %s18, 1
      %p41 = por %p39, %p40
      %p43 = scmp.ne.s32.totalorder %s26, %s42
      %p44 = scmp.eq.s32.totalorder %s18, 0
      %p45 = por %p43, %p44
      %s47 = sadd.s32 %s46, 1
      %p50 = scmp.eq.s32.totalorder %s12, 1
      %p51 = scmp.ne.s32.totalorder %s46, %s48
      %p52 = scmp.eq.s32.totalorder %s12, 0
      %p53 = por %p51, %p52
      %p54 = scmp.ne.s32.totalorder %s46, %s48
      %p55 = scmp.eq.s32.totalorder %s17, 1
      %p56 = por %p54, %p55
      %p57 = scmp.ne.s32.totalorder %s48, %s49
      %p58 = scmp.eq.s32.totalorder %s17, 0
      %p59 = por %p57, %p58
      %p60 = scmp.ne.s32.totalorder %s48, %s49
      %p61 = scmp.eq.s32.totalorder %s18, 1
      %p62 = por %p60, %p61
      %p64 = scmp.ne.s32.totalorder %s49, %s63
      %p65 = scmp.eq.s32.totalorder %s18, 0
      %p66 = por %p64, %p65
      %s68 = sadd.s32 %s67, 1
      %p71 = scmp.eq.s32.totalorder %s12, 1
      %p72 = scmp.ne.s32.totalorder %s67, %s69
      %p73 = scmp.eq.s32.totalorder %s12, 0
      %p74 = por %p72, %p73
      %p75 = scmp.ne.s32.totalorder %s67, %s69
      %p76 = scmp.eq.s32.totalorder %s17, 1
      %p77 = por %p75, %p76
      %p78 = scmp.ne.s32.totalorder %s69, %s70
      %p79 = scmp.eq.s32.totalorder %s17, 0
      %p80 = por %p78, %p79
      %p81 = scmp.ne.s32.totalorder %s69, %s70
      %p82 = scmp.eq.s32.totalorder %s18, 1
      %p83 = por %p81, %p82
      %p85 = scmp.ne.s32.totalorder %s70, %s84
      %p86 = scmp.eq.s32.totalorder %s18, 0
      %p87 = por %p85, %p86
      %s88 = ssub.s32 %s12, %s19
      %p89 = scmp.eq.s32.totalorder %s88, 0
      %s91 = sadd.s32 %s90, 1
      %s92 = scalar_select %p89, %s90, %s91
      %p95 = pneg %p89
      %p96 = scmp.eq.s32.totalorder %s12, 1
      %p97 = por %p95, %p96
      %p98 = scmp.ne.s32.totalorder %s90, %s93
      %p99 = scmp.eq.s32.totalorder %s12, 0
      %p100 = por %p98, %p99
      %p101 = scmp.ne.s32.totalorder %s90, %s93
      %p102 = scmp.eq.s32.totalorder %s17, 1
      %p103 = por %p101, %p102
      %p104 = scmp.ne.s32.totalorder %s93, %s94
      %p105 = scmp.eq.s32.totalorder %s17, 0
      %p106 = por %p104, %p105
      %p107 = scmp.ne.s32.totalorder %s93, %s94
      %p108 = scmp.eq.s32.totalorder %s18, 1
      %p109 = por %p107, %p108
      %p111 = scmp.ne.s32.totalorder %s94, %s110
      %p112 = scmp.eq.s32.totalorder %s18, 0
      %p113 = por %p111, %p112
      %p114 = scmp.le.s32.totalorder 1, %s12
      %p115 = scmp.lt.s32.totalorder %s12, 3
      %p116 = pnand %p114, %p115
      %p117 = pneg %p116
      // Predicated region
      $region9: #{tpu_custom_call.1} parent=5 // pred_check
        _
      $region10: #{tpu_custom_call.1} parent=5 // pred_check_branch
        %119 = sbr.rel (%p116) target = $region12
      $region11: #{tpu_custom_call.1} parent=5 // pred_region
        %s120 = ssub.s32 %s12, 1
        // Predicated region
        $region13: #{tpu_custom_call.1} parent=11 // pred_check
          %p121 = pneg %p59
        $region14: #{tpu_custom_call.1} parent=11 // pred_check_branch
          %123 = sbr.rel (%p121) target = $region16
        $region15: #{tpu_custom_call.1} parent=11 // pred_region
          _
        $region16: #{tpu_custom_call.1} parent=11 // pred_fallthru
          _
        // Predicated region
        $region17: #{tpu_custom_call.1} parent=11 // pred_check
          %p124 = pneg %p80
        $region18: #{tpu_custom_call.1} parent=11 // pred_check_branch
          %126 = sbr.rel (%p124) target = $region20
        $region19: #{tpu_custom_call.1} parent=11 // pred_region
          _
        $region20: #{tpu_custom_call.1} parent=11 // pred_fallthru
          _
      $region12: #{tpu_custom_call.1} parent=5 // pred_fallthru
        _
      %p127 = scmp.lt.s32.totalorder %s12, 2
      // Predicated region
      $region21: #{tpu_custom_call.1} parent=5 // pred_check
        %p128 = pneg %p127
      $region22: #{tpu_custom_call.1} parent=5 // pred_check_branch
        %130 = sbr.rel (%p128) target = $region24
      $region23: #{tpu_custom_call.1} parent=5 // pred_region
        // Predicated region
        $region25: #{tpu_custom_call.1} parent=23 // pred_check
          %p131 = pneg %p32
        $region26: #{tpu_custom_call.1} parent=23 // pred_check_branch
          %133 = sbr.rel (%p131) target = $region28
        $region27: #{tpu_custom_call.1} parent=23 // pred_region
          %p134 = scmp.lt.s32.totalorder %s12, 1
          %s135 = scalar_select %p134, %s12, 1
          %s136 = smul.addr %s135, 64
          %s137 = smul.addr %s136, 4
          %s138 = scalar_lea.vmem %s0, %s137
        $region28: #{tpu_custom_call.1} parent=23 // pred_fallthru
          _
      $region24: #{tpu_custom_call.1} parent=5 // pred_fallthru
        _
      %p139 = scmp.le.s32.totalorder 1, %s12
      %p140 = scmp.lt.s32.totalorder %s12, 3
      %p141 = pnand %p139, %p140
      %p142 = pneg %p141
      // Predicated region
      $region29: #{tpu_custom_call.1} parent=5 // pred_check
        _
      $region30: #{tpu_custom_call.1} parent=5 // pred_check_branch
        %144 = sbr.rel (%p141) target = $region32
      $region31: #{tpu_custom_call.1} parent=5 // pred_region
        %s145 = ssub.s32 %s12, 1
        %p146 = scmp.lt.s32.totalorder %s17, 1
        %s147 = scalar_select %p146, %s17, 1
        %s148 = smul.addr %s147, 64
        %s149 = smul.addr %s148, 4
        %s150 = scalar_lea.vmem %s0, %s149
        %p151 = pneg %p38
        %p152 = pneg %p35
        %p153 = pneg %p59
        %p154 = pneg %p56
        %p155 = pneg %p80
        %p156 = pneg %p77
        %p157 = pneg %p106
        %p158 = pneg %p103
        %s159 = sand.u32 %s93, 1
        %s160 = scalar_lea.sflag [#allocation3], %s159
        %s161 = sand.u32 %s93, 1
        %s162 = smul.addr %s161, 16
        %s163 = scalar_lea.vmem [#allocation2], %s162
        %p164 = scmp.lt.s32.totalorder %s17, 1
        %s165 = scalar_select %p164, %s17, 1
        %s166 = smul.addr %s165, 64
        %s167 = smul.addr %s166, 4
        %s168 = scalar_lea.vmem %s0, %s167
        %v169 = vld [vmem:[%s168] sm:$0xf]
        %v170 = vld [vmem:[%s168 + $0x4] sm:$0xf]
        %v171 = vld [vmem:[%s168 + $0x8] sm:$0xf]
        %v172 = vld [vmem:[%s168 + $0xc] sm:$0xf]
        %v173 = vld [vmem:[%s168 + $0x10] sm:$0xf]
        %v174 = vld [vmem:[%s168 + $0x14] sm:$0xf]
        %v175 = vld [vmem:[%s168 + $0x18] sm:$0xf]
        %v176 = vld [vmem:[%s168 + $0x1c] sm:$0xf]
        %v177 = vld [vmem:[%s168 + $0x20] sm:$0xf]
        %v178 = vld [vmem:[%s168 + $0x24] sm:$0xf]
        %v179 = vld [vmem:[%s168 + $0x28] sm:$0xf]
        %v180 = vld [vmem:[%s168 + $0x2c] sm:$0xf]
        %v181 = vld [vmem:[%s168 + $0x30] sm:$0xf]
        %v182 = vld [vmem:[%s168 + $0x34] sm:$0xf]
        %v183 = vld [vmem:[%s168 + $0x38] sm:$0xf]
        %v184 = vld [vmem:[%s168 + $0x3c] sm:$0xf]
        %v185 = vld [vmem:[%s168 + $0x40] sm:$0xf]
        %v186 = vld [vmem:[%s168 + $0x44] sm:$0xf]
        %v187 = vld [vmem:[%s168 + $0x48] sm:$0xf]
        %v188 = vld [vmem:[%s168 + $0x4c] sm:$0xf]
        %v189 = vld [vmem:[%s168 + $0x50] sm:$0xf]
        %v190 = vld [vmem:[%s168 + $0x54] sm:$0xf]
        %v191 = vld [vmem:[%s168 + $0x58] sm:$0xf]
        %v192 = vld [vmem:[%s168 + $0x5c] sm:$0xf]
        %v193 = vld [vmem:[%s168 + $0x60] sm:$0xf]
        %v194 = vld [vmem:[%s168 + $0x64] sm:$0xf]
        %v195 = vld [vmem:[%s168 + $0x68] sm:$0xf]
        %v196 = vld [vmem:[%s168 + $0x6c] sm:$0xf]
        %v197 = vld [vmem:[%s168 + $0x70] sm:$0xf]
        %v198 = vld [vmem:[%s168 + $0x74] sm:$0xf]
        %v199 = vld [vmem:[%s168 + $0x78] sm:$0xf]
        %v200 = vld [vmem:[%s168 + $0x7c] sm:$0xf]
        %v201 = vld [vmem:[%s168 + $0x80] sm:$0xf]
        %v202 = vld [vmem:[%s168 + $0x84] sm:$0xf]
        %v203 = vld [vmem:[%s168 + $0x88] sm:$0xf]
        %v204 = vld [vmem:[%s168 + $0x8c] sm:$0xf]
        %v205 = vld [vmem:[%s168 + $0x90] sm:$0xf]
        %v206 = vld [vmem:[%s168 + $0x94] sm:$0xf]
        %v207 = vld [vmem:[%s168 + $0x98] sm:$0xf]
        %v208 = vld [vmem:[%s168 + $0x9c] sm:$0xf]
        %v209 = vld [vmem:[%s168 + $0xa0] sm:$0xf]
        %v210 = vld [vmem:[%s168 + $0xa4] sm:$0xf]
        %v211 = vld [vmem:[%s168 + $0xa8] sm:$0xf]
        %v212 = vld [vmem:[%s168 + $0xac] sm:$0xf]
        %v213 = vld [vmem:[%s168 + $0xb0] sm:$0xf]
        %v214 = vld [vmem:[%s168 + $0xb4] sm:$0xf]
        %v215 = vld [vmem:[%s168 + $0xb8] sm:$0xf]
        %v216 = vld [vmem:[%s168 + $0xbc] sm:$0xf]
        %v217 = vld [vmem:[%s168 + $0xc0] sm:$0xf]
        %v218 = vld [vmem:[%s168 + $0xc4] sm:$0xf]
        %v219 = vld [vmem:[%s168 + $0xc8] sm:$0xf]
        %v220 = vld [vmem:[%s168 + $0xcc] sm:$0xf]
        %v221 = vld [vmem:[%s168 + $0xd0] sm:$0xf]
        %v222 = vld [vmem:[%s168 + $0xd4] sm:$0xf]
        %v223 = vld [vmem:[%s168 + $0xd8] sm:$0xf]
        %v224 = vld [vmem:[%s168 + $0xdc] sm:$0xf]
        %v225 = vld [vmem:[%s168 + $0xe0] sm:$0xf]
        %v226 = vld [vmem:[%s168 + $0xe4] sm:$0xf]
        %v227 = vld [vmem:[%s168 + $0xe8] sm:$0xf]
        %v228 = vld [vmem:[%s168 + $0xec] sm:$0xf]
        %v229 = vld [vmem:[%s168 + $0xf0] sm:$0xf]
        %v230 = vld [vmem:[%s168 + $0xf4] sm:$0xf]
        %v231 = vld [vmem:[%s168 + $0xf8] sm:$0xf]
        %v232 = vld [vmem:[%s168 + $0xfc] sm:$0xf]
        %v233 = vunpack.c.l.bf16 %v169
        %v234 = vunpack.c.l.bf16 %v170
        %v235 = vunpack.c.l.bf16 %v171
        %v236 = vunpack.c.l.bf16 %v172
        %v237 = vunpack.c.l.bf16 %v173
        %v238 = vunpack.c.l.bf16 %v174
        %v239 = vunpack.c.l.bf16 %v175
        %v240 = vunpack.c.l.bf16 %v176
        %v241 = vunpack.c.l.bf16 %v177
        %v242 = vunpack.c.l.bf16 %v178
        %v243 = vunpack.c.l.bf16 %v179
        %v244 = vunpack.c.l.bf16 %v180
        %v245 = vunpack.c.l.bf16 %v181
        %v246 = vunpack.c.l.bf16 %v182
        %v247 = vunpack.c.l.bf16 %v183
        %v248 = vunpack.c.l.bf16 %v184
        %v249 = vunpack.c.l.bf16 %v185
        %v250 = vunpack.c.l.bf16 %v186
        %v251 = vunpack.c.l.bf16 %v187
        %v252 = vunpack.c.l.bf16 %v188
        %v253 = vunpack.c.l.bf16 %v189
        %v254 = vunpack.c.l.bf16 %v190
        %v255 = vunpack.c.l.bf16 %v191
        %v256 = vunpack.c.l.bf16 %v192
        %v257 = vunpack.c.l.bf16 %v193
        %v258 = vunpack.c.l.bf16 %v194
        %v259 = vunpack.c.l.bf16 %v195
        %v260 = vunpack.c.l.bf16 %v196
        %v261 = vunpack.c.l.bf16 %v197
        %v262 = vunpack.c.l.bf16 %v198
        %v263 = vunpack.c.l.bf16 %v199
        %v264 = vunpack.c.l.bf16 %v200
        %v265 = vunpack.c.l.bf16 %v201
        %v266 = vunpack.c.l.bf16 %v202
        %v267 = vunpack.c.l.bf16 %v203
        %v268 = vunpack.c.l.bf16 %v204
        %v269 = vunpack.c.l.bf16 %v205
        %v270 = vunpack.c.l.bf16 %v206
        %v271 = vunpack.c.l.bf16 %v207
        %v272 = vunpack.c.l.bf16 %v208
        %v273 = vunpack.c.l.bf16 %v209
        %v274 = vunpack.c.l.bf16 %v210
        %v275 = vunpack.c.l.bf16 %v211
        %v276 = vunpack.c.l.bf16 %v212
        %v277 = vunpack.c.l.bf16 %v213
        %v278 = vunpack.c.l.bf16 %v214
        %v279 = vunpack.c.l.bf16 %v215
        %v280 = vunpack.c.l.bf16 %v216
        %v281 = vunpack.c.l.bf16 %v217
        %v282 = vunpack.c.l.bf16 %v218
        %v283 = vunpack.c.l.bf16 %v219
        %v284 = vunpack.c.l.bf16 %v220
        %v285 = vunpack.c.l.bf16 %v221
        %v286 = vunpack.c.l.bf16 %v222
        %v287 = vunpack.c.l.bf16 %v223
        %v288 = vunpack.c.l.bf16 %v224
        %v289 = vunpack.c.l.bf16 %v225
        %v290 = vunpack.c.l.bf16 %v226
        %v291 = vunpack.c.l.bf16 %v227
        %v292 = vunpack.c.l.bf16 %v228
        %v293 = vunpack.c.l.bf16 %v229
        %v294 = vunpack.c.l.bf16 %v230
        %v295 = vunpack.c.l.bf16 %v231
        %v296 = vunpack.c.l.bf16 %v232
        %v297 = vpack.c.bf16 %v234, %v233
        %v298 = vpack.c.bf16 %v236, %v235
        %v299 = vpack.c.bf16 %v238, %v237
        %v300 = vpack.c.bf16 %v240, %v239
        %v301 = vpack.c.bf16 %v242, %v241
        %v302 = vpack.c.bf16 %v244, %v243
        %v303 = vpack.c.bf16 %v246, %v245
        %v304 = vpack.c.bf16 %v248, %v247
        %v305 = vpack.c.bf16 %v250, %v249
        %v306 = vpack.c.bf16 %v252, %v251
        %v307 = vpack.c.bf16 %v254, %v253
        %v308 = vpack.c.bf16 %v256, %v255
        %v309 = vpack.c.bf16 %v258, %v257
        %v310 = vpack.c.bf16 %v260, %v259
        %v311 = vpack.c.bf16 %v262, %v261
        %v312 = vpack.c.bf16 %v264, %v263
        %v313 = vpack.c.bf16 %v266, %v265
        %v314 = vpack.c.bf16 %v268, %v267
        %v315 = vpack.c.bf16 %v270, %v269
        %v316 = vpack.c.bf16 %v272, %v271
        %v317 = vpack.c.bf16 %v274, %v273
        %v318 = vpack.c.bf16 %v276, %v275
        %v319 = vpack.c.bf16 %v278, %v277
        %v320 = vpack.c.bf16 %v280, %v279
        %v321 = vpack.c.bf16 %v282, %v281
        %v322 = vpack.c.bf16 %v284, %v283
        %v323 = vpack.c.bf16 %v286, %v285
        %v324 = vpack.c.bf16 %v288, %v287
        %v325 = vpack.c.bf16 %v290, %v289
        %v326 = vpack.c.bf16 %v292, %v291
        %v327 = vpack.c.bf16 %v294, %v293
        %v328 = vpack.c.bf16 %v296, %v295
        %v329 = vld [vmem:[%s1] sm:$0x3]
        %v330 = vld [vmem:[%s2] sm:$0xf]
        %332 = vset.pattern.permute.xlu0 0
        %333 = vperm.xlu0 %332, %v330
        %v334 = vpop.permute.xlu0 %333
        %vm336 = vcmask 31744
        %v338 = vsel %vm336, %v329, 0
        %v341 = vsel %vm336, %v297, 0
        %v344 = vsel %vm336, %v298, 0
        %v347 = vsel %vm336, %v299, 0
        %v350 = vsel %vm336, %v300, 0
        %v353 = vsel %vm336, %v301, 0
        %v356 = vsel %vm336, %v302, 0
        %v359 = vsel %vm336, %v303, 0
        %v362 = vsel %vm336, %v304, 0
        %v365 = vsel %vm336, %v305, 0
        %v368 = vsel %vm336, %v306, 0
        %v371 = vsel %vm336, %v307, 0
        %v374 = vsel %vm336, %v308, 0
        %v377 = vsel %vm336, %v309, 0
        %v380 = vsel %vm336, %v310, 0
        %v383 = vsel %vm336, %v311, 0
        %v386 = vsel %vm336, %v312, 0
        %v389 = vsel %vm336, %v313, 0
        %v392 = vsel %vm336, %v314, 0
        %v395 = vsel %vm336, %v315, 0
        %v398 = vsel %vm336, %v316, 0
        %v401 = vsel %vm336, %v317, 0
        %v404 = vsel %vm336, %v318, 0
        %v407 = vsel %vm336, %v319, 0
        %v410 = vsel %vm336, %v320, 0
        %v413 = vsel %vm336, %v321, 0
        %v416 = vsel %vm336, %v322, 0
        %v419 = vsel %vm336, %v323, 0
        %v422 = vsel %vm336, %v324, 0
        %v425 = vsel %vm336, %v325, 0
        %v428 = vsel %vm336, %v326, 0
        %v431 = vsel %vm336, %v327, 0
        %v434 = vsel %vm336, %v328, 0
        %436 = vmatpush.bf16.xpose.msra.mxu0 %v362
        %437 = vmatpush.bf16.xpose.msra.mxu0 %v359
        %438 = vmatpush.bf16.xpose.msra.mxu0 %v356
        %439 = vmatpush.bf16.xpose.msra.mxu0 %v353
        %440 = vmatpush.bf16.xpose.msra.mxu0 %v350
        %441 = vmatpush.bf16.xpose.msra.mxu0 %v347
        %442 = vmatpush.bf16.xpose.msra.mxu0 %v344
        %443 = vmatpush.bf16.xpose.msra.mxu0 %v341
        %444 = vmatmul.bf16.gmra.mxu0 %v338
        %v445 = vpop.f32.mrf.mxu0
        %v446 = vadd.f32 %v334, %v445
        %v447 = vpop.f32.mrf.mxu0
        %448 = vdwg.mxu0
        %449 = vmatpush.bf16.xpose.msra.mxu0 %v386
        %450 = vmatpush.bf16.xpose.msra.mxu0 %v383
        %451 = vmatpush.bf16.xpose.msra.mxu0 %v380
        %452 = vmatpush.bf16.xpose.msra.mxu0 %v377
        %453 = vmatpush.bf16.xpose.msra.mxu0 %v374
        %454 = vmatpush.bf16.xpose.msra.mxu0 %v371
        %455 = vmatpush.bf16.xpose.msra.mxu0 %v368
        %456 = vmatpush.bf16.xpose.msra.mxu0 %v365
        %457 = vmatmul.bf16.gmra.mxu0 %v338
        %v458 = vpop.f32.mrf.mxu0
        %v459 = vadd.f32 %v334, %v458
        %v460 = vpop.f32.mrf.mxu0
        %461 = vdwg.mxu0
        %462 = vmatpush.bf16.xpose.msra.mxu0 %v410
        %463 = vmatpush.bf16.xpose.msra.mxu0 %v407
        %464 = vmatpush.bf16.xpose.msra.mxu0 %v404
        %465 = vmatpush.bf16.xpose.msra.mxu0 %v401
        %466 = vmatpush.bf16.xpose.msra.mxu0 %v398
        %467 = vmatpush.bf16.xpose.msra.mxu0 %v395
        %468 = vmatpush.bf16.xpose.msra.mxu0 %v392
        %469 = vmatpush.bf16.xpose.msra.mxu0 %v389
        %470 = vmatmul.bf16.gmra.mxu0 %v338
        %v471 = vpop.f32.mrf.mxu0
        %v472 = vadd.f32 %v334, %v471
        %v473 = vpop.f32.mrf.mxu0
        %474 = vdwg.mxu0
        %475 = vmatpush.bf16.xpose.msra.mxu0 %v434
        %476 = vmatpush.bf16.xpose.msra.mxu0 %v431
        %477 = vmatpush.bf16.xpose.msra.mxu0 %v428
        %478 = vmatpush.bf16.xpose.msra.mxu0 %v425
        %479 = vmatpush.bf16.xpose.msra.mxu0 %v422
        %480 = vmatpush.bf16.xpose.msra.mxu0 %v419
        %481 = vmatpush.bf16.xpose.msra.mxu0 %v416
        %482 = vmatpush.bf16.xpose.msra.mxu0 %v413
        %483 = vmatmul.bf16.gmra.mxu0 %v338
        %v484 = vpop.f32.mrf.mxu0
        %v485 = vadd.f32 %v334, %v484
        %v486 = vpop.f32.mrf.mxu0
        %487 = vdwg.mxu0
        %vm488 = vcmp.ge.f32.partialorder %v446, 0.0
        %vm489 = vcmp.ge.f32.partialorder %v459, 0.0
        %vm490 = vcmp.ge.f32.partialorder %v472, 0.0
        %vm491 = vcmp.ge.f32.partialorder %v485, 0.0
        %v492 = vmul.f32 %v446, 0.2
        %v493 = vmul.f32 %v459, 0.2
        %v494 = vmul.f32 %v472, 0.2
        %v495 = vmul.f32 %v485, 0.2
        %v496 = vsel %vm488, %v446, %v492
        %v497 = vsel %vm489, %v459, %v493
        %v498 = vsel %vm490, %v472, %v494
        %v499 = vsel %vm491, %v485, %v495
        %vm500 = vcmask 1043456
        %v501 = vsel %vm500, %v496, 0.0
        %v502 = vsel %vm500, %v497, 0.0
        %v503 = vadd.f32 %v501, %v502
        %v504 = vsel %vm500, %v498, 0.0
        %v505 = vadd.f32 %v503, %v504
        %v506 = vsel %vm500, %v499, 0.0
        %v507 = vadd.f32 %v505, %v506
        %508 = vadd.xlane.f32.xlu0 %v507
        %v509 = vpop.xlane.xlu0 %508
        %v510 = vmul.f32 %v496, %v496
        %v511 = vmul.f32 %v497, %v497
        %v512 = vmul.f32 %v498, %v498
        %v513 = vmul.f32 %v499, %v499
        %v514 = vsel %vm500, %v510, 0.0
        %v515 = vsel %vm500, %v511, 0.0
        %v516 = vadd.f32 %v514, %v515
        %v517 = vsel %vm500, %v512, 0.0
        %v518 = vadd.f32 %v516, %v517
        %v519 = vsel %vm500, %v513, 0.0
        %v520 = vadd.f32 %v518, %v519
        %521 = vadd.xlane.f32.xlu0 %v520
        %v522 = vpop.xlane.xlu0 %521
        %v523 = vmul.f32 %v509, 0.001953125
        %v524 = vmul.f32 %v522, 0.001953125
        %v525 = vmul.f32 %v523, %v523
        %v526 = vsub.f32 %v524, %v525
        %v527 = vmax.f32 %v526, 0.0
        %v528 = vsub.f32 %v496, %v523
        %v529 = vsub.f32 %v497, %v523
        %v530 = vsub.f32 %v498, %v523
        %v531 = vsub.f32 %v499, %v523
        %v532 = vadd.f32 %v527, 1e-05
        %v533 = vrsqrt.pop %v532
        %v534 = vmul.f32 %v533, %v532
        %v535 = vmul.f32 %v534, %v533
        %v536 = vmul.f32 0.5, %v535
        %v537 = vsub.f32 1.5, %v536
        %v538 = vmul.f32 %v533, %v537
        %vm539 = vweird.f32 %v532
        %vm540 = vweird.f32 %v533
        %vm541 = vmor %vm539, %vm540
        %v542 = vsel %vm541, %v533, %v538
        %v543 = vmul.f32 %v528, %v542
        %v544 = vmul.f32 %v529, %v542
        %v545 = vmul.f32 %v530, %v542
        %v546 = vmul.f32 %v531, %v542
        %v551 = vrot.slane %v544, 4
        %v552 = vrot.slane %v546, 4
        %v553 = vsel %vm500, %v543, %v551
        %v554 = vsel %vm500, %v545, %v552
        %557 = vst [vmem:[%s163] sm:$0xff] %v553
        %558 = vst [vmem:[%s163 + $0x8] sm:$0xff] %v554
        %s559 = sand.u32 %s93, 1
        %s560 = scalar_lea.sflag [#allocation3], %s559
        %s561 = sand.u32 %s93, 1
        %s562 = smul.addr %s561, 16
        %s563 = scalar_lea.vmem [#allocation2], %s562
        // Predicated region
        $region33: #{tpu_custom_call.1} parent=31 // pred_check
          %p564 = pneg %p103
        $region34: #{tpu_custom_call.1} parent=31 // pred_check_branch
          %566 = sbr.rel (%p564) target = $region36
        $region35: #{tpu_custom_call.1} parent=31 // pred_region
          %568 = vsyncadd %s560, 0
          %s569 = smul.addr %s17, 4
          %s570 = smul.addr %s569, 4
          %s571 = scalar_lea.hbm %s3, %s570
          %s573 = sshll.u32 %s563, 4
          %s574 = int_to_ptr.vmem [resolvable:$true] %s573
          %s575 = sshll.u32 %s571, 4
          %s576 = int_to_ptr.hbm [resolvable:$true] %s575
          %578 = dma.vmem_to_hbm [thread:$0]  %s574, 256, %s576, %s560
        $region36: #{tpu_custom_call.1} parent=31 // pred_fallthru
          _
      $region32: #{tpu_custom_call.1} parent=5 // pred_fallthru
        _
      %p579 = scmp.le.s32.totalorder 2, %s12
      // Predicated region
      $region37: #{tpu_custom_call.1} parent=5 // pred_check
        %p580 = pneg %p579
      $region38: #{tpu_custom_call.1} parent=5 // pred_check_branch
        %582 = sbr.rel (%p580) target = $region40
      $region39: #{tpu_custom_call.1} parent=5 // pred_region
        %s583 = ssub.s32 %s12, 2
        // Predicated region
        $region41: #{tpu_custom_call.1} parent=39 // pred_check
          %p584 = pneg %p109
        $region42: #{tpu_custom_call.1} parent=39 // pred_check_branch
          %586 = sbr.rel (%p584) target = $region44
        $region43: #{tpu_custom_call.1} parent=39 // pred_region
          %s587 = sand.u32 %s94, 1
          %s588 = scalar_lea.sflag [#allocation3], %s587
          %s589 = sand.u32 %s94, 1
          %s590 = smul.addr %s589, 16
          %s591 = scalar_lea.vmem [#allocation2], %s590
          %593 = dma.done %s588, 256
        $region44: #{tpu_custom_call.1} parent=39 // pred_fallthru
          _
      $region40: #{tpu_custom_call.1} parent=5 // pred_fallthru
        _
    $region6: #{tpu_custom_call.1} parent=1 // loop_footer
      %s16 = sadd.s32 1, %s12
    $region7: #{tpu_custom_call.1} parent=1 // loop_footer_branch
      %11 = sbr.rel target = $region3
    $region8: #{tpu_custom_call.1} parent=1 // loop_exit
      _
    %594 = vsyncpa [#allocation3], 1
    %s595 = scalar_lea.sflag [#allocation3], 1
    %596 = vsyncpa %s595, 1

</llo_original>
